<compile_context>
chip_gen: v6e
topology: v6e:2x2x1
jax: 0.10.0
libtpu: 0.0.40
codegen_flags: <defaults>
</compile_context>

<pallas_src>
import jax
import jax.numpy as jnp
from jax.experimental import pallas as pl
from jax.experimental.pallas import tpu as pltpu


_LANE = 128
_SUBLANE = 8


def _ae_forward_kernel(
    x_ref,
    w1_ref, b1_ref,
    w2_ref, b2_ref,
    w3_ref, b3_ref,
    w4_ref, b4_ref,
    out_ref,
):
    """Fused MLP autoencoder forward for one batch tile.

    x_ref  : (TB, D)   VMEM tile of the input batch (D unpadded)
    w*_ref : full weight matrices, inner dims padded to 128, resident in VMEM
             (possibly bf16); b*_ref are (1, out) f32 biases.
    out_ref: (TB, D)   reconstruction tile
    """
    mm_dtype = w1_ref.dtype
    x = x_ref[...]

    # encode
    h1 = jnp.dot(x.astype(mm_dtype), w1_ref[...],
                 preferred_element_type=jnp.float32) + b1_ref[...]
    h1 = jnp.maximum(h1, 0.0)
    z = jnp.dot(h1.astype(mm_dtype), w2_ref[...],
                preferred_element_type=jnp.float32) + b2_ref[...]
    z = jnp.maximum(z, 0.0)

    # decode
    h2 = jnp.dot(z.astype(mm_dtype), w3_ref[...],
                 preferred_element_type=jnp.float32) + b3_ref[...]
    h2 = jnp.maximum(h2, 0.0)
    y = jnp.dot(h2.astype(mm_dtype), w4_ref[...],
                preferred_element_type=jnp.float32) + b4_ref[...]

    out_ref[...] = y.astype(out_ref.dtype)


def _round_up(n: int, m: int) -> int:
    return ((n + m - 1) // m) * m


def _pad2(a, rows, cols):
    return jnp.pad(a, ((0, rows - a.shape[0]), (0, cols - a.shape[1])))


def prepare_params(params, *, matmul_dtype=jnp.bfloat16):
    """One-time preprocessing: pad hidden/latent dims to 128 lanes and pre-cast
    the (loop-invariant, VMEM-resident) weights to the matmul dtype.

    Exactness: padded weight rows/cols and padded biases are zero, and
    ReLU(0)=0, so padded lanes stay identically zero end-to-end.  The feature
    dim D is intentionally left unpadded (it is the only dim that touches HBM).
    """
    D = params["w1"].shape[0]
    H = params["w1"].shape[1]
    L = params["w2"].shape[1]
    Hp = _round_up(H, _LANE)
    Lp = _round_up(L, _LANE)

    return dict(
        w1=_pad2(params["w1"], D, Hp).astype(matmul_dtype),
        b1=_pad2(params["b1"], 1, Hp).astype(jnp.float32),
        w2=_pad2(params["w2"], Hp, Lp).astype(matmul_dtype),
        b2=_pad2(params["b2"], 1, Lp).astype(jnp.float32),
        w3=_pad2(params["w3"], Lp, Hp).astype(matmul_dtype),
        b3=_pad2(params["b3"], 1, Hp).astype(jnp.float32),
        w4=_pad2(params["w4"], Hp, D).astype(matmul_dtype),
        b4=_pad2(params["b4"], 1, D).astype(jnp.float32),
    )


def autoencoder_forward(x, prepared, *, tb=2048):
    """Run the fused autoencoder forward pass with Pallas.

    x        : [N, D] float32
    prepared : output of prepare_params (padded / pre-cast weights & biases)
    tb       : requested batch tile size (rows per grid step).
    """
    N, D = x.shape
    Hp = prepared["w1"].shape[1]
    Lp = prepared["w2"].shape[1]

    # Effective batch tile: multiple of the sublane (8), at most the requested
    # tb, and capped so the batch grid has >=2 "parallel" steps whenever N
    # allows it (keeps both v7x TensorCores busy).
    half_n = _round_up(max((N + 1) // 2, 1), _SUBLANE)
    tb_eff = max(_SUBLANE, min(_round_up(tb, _SUBLANE), half_n))

    Np = _round_up(N, tb_eff)
    x_p = x if Np == N else jnp.pad(x, ((0, Np - N), (0, 0)))

    grid = (Np // tb_eff,)

    # Weights/biases are small and loop-invariant: keep them resident in VMEM
    # for the whole call instead of re-streaming them every grid step.
    resident = pl.BlockSpec(memory_space=pltpu.MemorySpace.VMEM)

    weight_bytes = sum(int(v.size) * v.dtype.itemsize for v in prepared.values())
    cost = pl.CostEstimate(
        flops=2 * N * (D * Hp + Hp * Lp + Lp * Hp + Hp * D),
        transcendentals=0,
        bytes_accessed=2 * N * D * x.dtype.itemsize + weight_bytes,
    )

    out = pl.pallas_call(
        _ae_forward_kernel,
        out_shape=jax.ShapeDtypeStruct((Np, D), x.dtype),
        grid_spec=pltpu.PrefetchScalarGridSpec(
            num_scalar_prefetch=0,
            grid=grid,
            in_specs=[
                pl.BlockSpec((tb_eff, D), lambda i: (i, 0)),     # x batch tile
                resident, resident,                              # w1, b1
                resident, resident,                              # w2, b2
                resident, resident,                              # w3, b3
                resident, resident,                              # w4, b4
            ],
            out_specs=pl.BlockSpec((tb_eff, D), lambda i: (i, 0)),
        ),
        compiler_params=pltpu.CompilerParams(
            dimension_semantics=("parallel",),
            # Cap: within v7x's 64 MiB physical (with headroom), and raises
            # v5e's 16 MiB scoped default so bigger batch tiles are allowed.
            vmem_limit_bytes=48 * 1024 * 1024,
        ),
        cost_estimate=cost,
    )(x_p, prepared["w1"], prepared["b1"], prepared["w2"], prepared["b2"],
      prepared["w3"], prepared["b3"], prepared["w4"], prepared["b4"])

    return out if Np == N else out[:N]


def init_params(key, d_in, d_hidden, d_latent):
    """Deterministic synthetic parameter init (PyTorch-Linear-like uniform)."""
    ks = jax.random.split(key, 8)

    def linear(kw, kb, fan_in, fan_out):
        bound = 1.0 / jnp.sqrt(fan_in)
        w = jax.random.uniform(kw, (fan_in, fan_out), jnp.float32, -bound, bound)
        b = jax.random.uniform(kb, (1, fan_out), jnp.float32, -bound, bound)
        return w, b

    w1, b1 = linear(ks[0], ks[1], d_in, d_hidden)
    w2, b2 = linear(ks[2], ks[3], d_hidden, d_latent)
    w3, b3 = linear(ks[4], ks[5], d_latent, d_hidden)
    w4, b4 = linear(ks[6], ks[7], d_hidden, d_in)
    return dict(w1=w1, b1=b1, w2=w2, b2=b2, w3=w3, b3=b3, w4=w4, b4=b4)


def _reference_forward(x, p):
    """Pure-JAX reference (mirrors the PyTorch forward = decode(encode(x)))."""
    h1 = jnp.maximum(x @ p["w1"] + p["b1"], 0.0)
    z = jnp.maximum(h1 @ p["w2"] + p["b2"], 0.0)
    h2 = jnp.maximum(z @ p["w3"] + p["b3"], 0.0)
    return h2 @ p["w4"] + p["b4"]


if __name__ == "__main__":
    key = jax.random.PRNGKey(0)
    k_x, k_p = jax.random.split(key)

    # batch, features, hidden, latent — small, consistent with the MLP AE spec.
    N, D, H, L = 256, 32, 64, 8
    x = jax.random.normal(k_x, (N, D), jnp.float32)
    params = init_params(k_p, D, H, L)
    y_ref = _reference_forward(x, params)

    # Exactness check first (f32 matmuls): verifies padding math is lossless.
    prepared_f32 = prepare_params(params, matmul_dtype=jnp.float32)
    y32 = jax.block_until_ready(autoencoder_forward(x, prepared_f32))
    assert y32.shape == (N, D)
    assert jnp.allclose(y32, y_ref, atol=1e-4, rtol=1e-4), "f32 mismatch vs reference"

    # Performance path: bf16 weights/activation operands, f32 accumulation.
    prepared = prepare_params(params)            # bf16 matmul dtype (default)
    y = jax.block_until_ready(autoencoder_forward(x, prepared))
    assert y.shape == (N, D)
    assert jnp.allclose(y, y_ref, atol=5e-2, rtol=5e-2), "bf16 mismatch vs reference"

    # Also exercise a non-tile-aligned batch to check the padding path.
    x2 = jax.random.normal(jax.random.PRNGKey(1), (100, D), jnp.float32)
    y2 = jax.block_until_ready(autoencoder_forward(x2, prepared))
    assert jnp.allclose(y2, _reference_forward(x2, params), atol=5e-2, rtol=5e-2)

    # TODO(synk): the PyTorch base class is abstract; encoder/decoder layer
    # stacks are supplied by subclasses — this kernel fuses the canonical
    # Linear/ReLU MLP instantiation.
    print("KERNEL_OK")
</pallas_src>

<mosaic_0001>
module attributes {stable_mosaic.version = 11 : i64} {
  func.func @_ae_forward_kernel(%arg0: i32, %arg1: memref<128x32xf32, #tpu.memory_space<vmem>>, %arg2: memref<32x128xf32, #tpu.memory_space<vmem>>, %arg3: memref<1x128xf32, #tpu.memory_space<vmem>>, %arg4: memref<128x128xf32, #tpu.memory_space<vmem>>, %arg5: memref<1x128xf32, #tpu.memory_space<vmem>>, %arg6: memref<128x128xf32, #tpu.memory_space<vmem>>, %arg7: memref<1x128xf32, #tpu.memory_space<vmem>>, %arg8: memref<128x32xf32, #tpu.memory_space<vmem>>, %arg9: memref<1x32xf32, #tpu.memory_space<vmem>>, %arg10: memref<128x32xf32, #tpu.memory_space<vmem>>) attributes {dimension_semantics = [#tpu.dimension_semantics<parallel>], iteration_bounds = array<i64: 2>, scalar_prefetch = 0 : i64, scratch_operands = 0 : i64, tpu.core_type = #tpu.core_type<tc>, window_params = [{transform_indices = @transform_0, window_bounds = array<i64: 128, 32>}, {pipeline_mode = #tpu.pipeline_mode<synchronous>, transform_indices = @transform_1, window_bounds = array<i64: 32, 128>}, {pipeline_mode = #tpu.pipeline_mode<synchronous>, transform_indices = @transform_2, window_bounds = array<i64: 1, 128>}, {pipeline_mode = #tpu.pipeline_mode<synchronous>, transform_indices = @transform_3, window_bounds = array<i64: 128, 128>}, {pipeline_mode = #tpu.pipeline_mode<synchronous>, transform_indices = @transform_4, window_bounds = array<i64: 1, 128>}, {pipeline_mode = #tpu.pipeline_mode<synchronous>, transform_indices = @transform_5, window_bounds = array<i64: 128, 128>}, {pipeline_mode = #tpu.pipeline_mode<synchronous>, transform_indices = @transform_6, window_bounds = array<i64: 1, 128>}, {pipeline_mode = #tpu.pipeline_mode<synchronous>, transform_indices = @transform_7, window_bounds = array<i64: 128, 32>}, {pipeline_mode = #tpu.pipeline_mode<synchronous>, transform_indices = @transform_8, window_bounds = array<i64: 1, 32>}, {transform_indices = @transform_9, window_bounds = array<i64: 128, 32>}]} {
    %c0 = arith.constant 0 : index
    %c0_0 = arith.constant 0 : index
    %0 = vector.load %arg1[%c0, %c0_0] : memref<128x32xf32, #tpu.memory_space<vmem>>, vector<128x32xf32>
    %c0_1 = arith.constant 0 : index
    %c0_2 = arith.constant 0 : index
    %1 = vector.load %arg2[%c0_1, %c0_2] : memref<32x128xf32, #tpu.memory_space<vmem>>, vector<32x128xf32>
    %cst = arith.constant dense<0.000000e+00> : vector<128x128xf32>
    %2 = tpu.matmul %0, %1, %cst {dimension_numbers = #tpu.dot_dimension_numbers<[1], [0], [0], [1], [0, 0, 1, 1], [], []>} : vector<128x32xf32>, vector<32x128xf32>, vector<128x128xf32> -> vector<128x128xf32>
    %c0_3 = arith.constant 0 : index
    %c0_4 = arith.constant 0 : index
    %3 = vector.load %arg3[%c0_3, %c0_4] : memref<1x128xf32, #tpu.memory_space<vmem>>, vector<1x128xf32>
    %4 = vector.broadcast %3 : vector<1x128xf32> to vector<128x128xf32>
    %5 = arith.addf %2, %4 : vector<128x128xf32>
    %cst_5 = arith.constant 0.000000e+00 : f32
    %6 = vector.broadcast %cst_5 : f32 to vector<128x128xf32>
    %7 = arith.maximumf %5, %6 : vector<128x128xf32>
    %c0_6 = arith.constant 0 : index
    %c0_7 = arith.constant 0 : index
    %8 = vector.load %arg4[%c0_6, %c0_7] : memref<128x128xf32, #tpu.memory_space<vmem>>, vector<128x128xf32>
    %cst_8 = arith.constant dense<0.000000e+00> : vector<128x128xf32>
    %9 = tpu.matmul %7, %8, %cst_8 {dimension_numbers = #tpu.dot_dimension_numbers<[1], [0], [0], [1], [0, 0, 1, 1], [], []>} : vector<128x128xf32>, vector<128x128xf32>, vector<128x128xf32> -> vector<128x128xf32>
    %c0_9 = arith.constant 0 : index
    %c0_10 = arith.constant 0 : index
    %10 = vector.load %arg5[%c0_9, %c0_10] : memref<1x128xf32, #tpu.memory_space<vmem>>, vector<1x128xf32>
    %11 = vector.broadcast %10 : vector<1x128xf32> to vector<128x128xf32>
    %12 = arith.addf %9, %11 : vector<128x128xf32>
    %cst_11 = arith.constant 0.000000e+00 : f32
    %13 = vector.broadcast %cst_11 : f32 to vector<128x128xf32>
    %14 = arith.maximumf %12, %13 : vector<128x128xf32>
    %c0_12 = arith.constant 0 : index
    %c0_13 = arith.constant 0 : index
    %15 = vector.load %arg6[%c0_12, %c0_13] : memref<128x128xf32, #tpu.memory_space<vmem>>, vector<128x128xf32>
    %cst_14 = arith.constant dense<0.000000e+00> : vector<128x128xf32>
    %16 = tpu.matmul %14, %15, %cst_14 {dimension_numbers = #tpu.dot_dimension_numbers<[1], [0], [0], [1], [0, 0, 1, 1], [], []>} : vector<128x128xf32>, vector<128x128xf32>, vector<128x128xf32> -> vector<128x128xf32>
    %c0_15 = arith.constant 0 : index
    %c0_16 = arith.constant 0 : index
    %17 = vector.load %arg7[%c0_15, %c0_16] : memref<1x128xf32, #tpu.memory_space<vmem>>, vector<1x128xf32>
    %18 = vector.broadcast %17 : vector<1x128xf32> to vector<128x128xf32>
    %19 = arith.addf %16, %18 : vector<128x128xf32>
    %cst_17 = arith.constant 0.000000e+00 : f32
    %20 = vector.broadcast %cst_17 : f32 to vector<128x128xf32>
    %21 = arith.maximumf %19, %20 : vector<128x128xf32>
    %c0_18 = arith.constant 0 : index
    %c0_19 = arith.constant 0 : index
    %22 = vector.load %arg8[%c0_18, %c0_19] : memref<128x32xf32, #tpu.memory_space<vmem>>, vector<128x32xf32>
    %cst_20 = arith.constant dense<0.000000e+00> : vector<128x32xf32>
    %23 = tpu.matmul %21, %22, %cst_20 {dimension_numbers = #tpu.dot_dimension_numbers<[1], [0], [0], [1], [0, 0, 1, 1], [], []>} : vector<128x128xf32>, vector<128x32xf32>, vector<128x32xf32> -> vector<128x32xf32>
    %c0_21 = arith.constant 0 : index
    %c0_22 = arith.constant 0 : index
    %24 = vector.load %arg9[%c0_21, %c0_22] : memref<1x32xf32, #tpu.memory_space<vmem>>, vector<1x32xf32>
    %25 = vector.broadcast %24 : vector<1x32xf32> to vector<128x32xf32>
    %26 = arith.addf %23, %25 : vector<128x32xf32>
    %c0_23 = arith.constant 0 : index
    %c0_24 = arith.constant 0 : index
    %27 = vector.load %arg10[%c0_23, %c0_24] : memref<128x32xf32, #tpu.memory_space<vmem>>, vector<128x32xf32>
    tpu.vector_store %arg10[%c0_23, %c0_24], %26 {strides = array<i32>} : memref<128x32xf32, #tpu.memory_space<vmem>>, vector<128x32xf32>,
    return
  }
  func.func @transform_0(%arg0: i32) -> (i32, i32) {
    %c0_i32 = arith.constant 0 : i32
    %c0_i32_0 = arith.constant 0 : i32
    return %arg0, %c0_i32 : i32, i32
  }
  func.func @transform_1(%arg0: i32) -> (i32, i32) {
    %c0_i32 = arith.constant 0 : i32
    %c0_i32_0 = arith.constant 0 : i32
    %c0_i32_1 = arith.constant 0 : i32
    return %c0_i32, %c0_i32_0 : i32, i32
  }
  func.func @transform_2(%arg0: i32) -> (i32, i32) {
    %c0_i32 = arith.constant 0 : i32
    %c0_i32_0 = arith.constant 0 : i32
    %c0_i32_1 = arith.constant 0 : i32
    return %c0_i32, %c0_i32_0 : i32, i32
  }
  func.func @transform_3(%arg0: i32) -> (i32, i32) {
    %c0_i32 = arith.constant 0 : i32
    %c0_i32_0 = arith.constant 0 : i32
    %c0_i32_1 = arith.constant 0 : i32
    return %c0_i32, %c0_i32_0 : i32, i32
  }
  func.func @transform_4(%arg0: i32) -> (i32, i32) {
    %c0_i32 = arith.constant 0 : i32
    %c0_i32_0 = arith.constant 0 : i32
    %c0_i32_1 = arith.constant 0 : i32
    return %c0_i32, %c0_i32_0 : i32, i32
  }
  func.func @transform_5(%arg0: i32) -> (i32, i32) {
    %c0_i32 = arith.constant 0 : i32
    %c0_i32_0 = arith.constant 0 : i32
    %c0_i32_1 = arith.constant 0 : i32
    return %c0_i32, %c0_i32_0 : i32, i32
  }
  func.func @transform_6(%arg0: i32) -> (i32, i32) {
    %c0_i32 = arith.constant 0 : i32
    %c0_i32_0 = arith.constant 0 : i32
    %c0_i32_1 = arith.constant 0 : i32
    return %c0_i32, %c0_i32_0 : i32, i32
  }
  func.func @transform_7(%arg0: i32) -> (i32, i32) {
    %c0_i32 = arith.constant 0 : i32
    %c0_i32_0 = arith.constant 0 : i32
    %c0_i32_1 = arith.constant 0 : i32
    return %c0_i32, %c0_i32_0 : i32, i32
  }
  func.func @transform_8(%arg0: i32) -> (i32, i32) {
    %c0_i32 = arith.constant 0 : i32
    %c0_i32_0 = arith.constant 0 : i32
    %c0_i32_1 = arith.constant 0 : i32
    return %c0_i32, %c0_i32_0 : i32, i32
  }
  func.func @transform_9(%arg0: i32) -> (i32, i32) {
    %c0_i32 = arith.constant 0 : i32
    %c0_i32_0 = arith.constant 0 : i32
    return %arg0, %c0_i32 : i32, i32
  }
}

</mosaic_0001>

<llo_original>
// kernel: tpu_custom_call.1
$region0: #{tpu_custom_call.1}
  #allocation0 [shape = 'u32[]', space=smem, size = 0x4, offset = 0x4, fixed_abs, tag = 'smem constant byte address 0x4 - core index']
  #allocation1 [shape = 'u32[144,128]{1,0:T(1,128)}', space=vmem, size = 0x12000, scoped, tag = 'internal scratch']
  %s0 = inlined_call_operand.vmem [shape: f32[256,32], index: 0, kind: input, shape index: {}]
  %s1 = inlined_call_operand.vmem [shape: f32[32,128], index: 1, kind: input, shape index: {}]
  %s2 = inlined_call_operand.vmem [shape: f32[1,128], index: 2, kind: input, shape index: {}]
  %s3 = inlined_call_operand.vmem [shape: f32[128,128], index: 3, kind: input, shape index: {}]
  %s4 = inlined_call_operand.vmem [shape: f32[1,128], index: 4, kind: input, shape index: {}]
  %s5 = inlined_call_operand.vmem [shape: f32[128,128], index: 5, kind: input, shape index: {}]
  %s6 = inlined_call_operand.vmem [shape: f32[1,128], index: 6, kind: input, shape index: {}]
  %s7 = inlined_call_operand.vmem [shape: f32[128,32], index: 7, kind: input, shape index: {}]
  %s8 = inlined_call_operand.vmem [shape: f32[1,32], index: 8, kind: input, shape index: {}]
  %s9 = inlined_call_operand.vmem [shape: f32[256,32], index: 9, kind: output, shape index: {}]
  %s10 = sld [smem:[#allocation0]]
  $region69: #{tpu_custom_call.1} parent=0
    _
  %s12 = ssub.s32 1, %s10
  %s13 = scalar_select 0, %s12, %s10
  loop: start=0, step=1, limit=4
  $region2: #{tpu_custom_call.1} parent=0 // loop_pre_header
    _
  $region3: #{tpu_custom_call.1} parent=0 // loop_header
    %s15 = sphi 0, %s19
    %p16 = scmp.ge.s32.totalorder %s15, 4
    %s25 = sphi 0, %s27
    %s28 = sphi 0, %s25
    %s29 = sphi 0, %s28
    %s45 = sphi 0, %s29
    %s49 = sphi 0, %s49
    %s51 = sphi 0, %s49
    %s52 = sphi 0, %s51
    %s66 = sphi 0, %s52
    %s70 = sphi 0, %s70
    %s72 = sphi 0, %s70
    %s73 = sphi 0, %s72
    %s87 = sphi 0, %s73
    %s91 = sphi 0, %s91
    %s93 = sphi 0, %s91
    %s94 = sphi 0, %s93
    %s108 = sphi 0, %s94
    %s112 = sphi 0, %s112
    %s114 = sphi 0, %s112
    %s115 = sphi 0, %s114
    %s129 = sphi 0, %s115
    %s133 = sphi 0, %s133
    %s135 = sphi 0, %s133
    %s136 = sphi 0, %s135
    %s150 = sphi 0, %s136
    %s154 = sphi 0, %s154
    %s156 = sphi 0, %s154
    %s157 = sphi 0, %s156
    %s171 = sphi 0, %s157
    %s175 = sphi 0, %s175
    %s177 = sphi 0, %s175
    %s178 = sphi 0, %s177
    %s192 = sphi 0, %s178
    %s196 = sphi 0, %s196
    %s198 = sphi 0, %s196
    %s199 = sphi 0, %s198
    %s213 = sphi 0, %s199
    %s219 = sphi 0, %s221
    %s222 = sphi 0, %s219
    %s223 = sphi 0, %s222
    %s239 = sphi 0, %s223
  $region4: #{tpu_custom_call.1} parent=0 // loop_header_branch
    %18 = sbr.rel (%p16) target = $region8
  $region5: #{tpu_custom_call.1} parent=0 // loop_body
    %s20 = ssub.s32 %s15, 1
    %s21 = ssub.s32 %s15, 2
    %s22 = sadd.s32 %s15, 1
    %s23 = ssub.s32 %s15, %s22
    %p24 = scmp.eq.s32.totalorder %s23, 0
    %s26 = sadd.s32 %s25, 1
    %s27 = scalar_select %p24, %s25, %s26
    %p30 = pneg %p24
    %p31 = scmp.eq.s32.totalorder %s15, 1
    %p32 = por %p30, %p31
    %p33 = scmp.ne.s32.totalorder %s25, %s28
    %p34 = scmp.eq.s32.totalorder %s15, 0
    %p35 = por %p33, %p34
    %p36 = scmp.ne.s32.totalorder %s25, %s28
    %p37 = scmp.eq.s32.totalorder %s20, 1
    %p38 = por %p36, %p37
    %p39 = scmp.ne.s32.totalorder %s28, %s29
    %p40 = scmp.eq.s32.totalorder %s20, 0
    %p41 = por %p39, %p40
    %p42 = scmp.ne.s32.totalorder %s28, %s29
    %p43 = scmp.eq.s32.totalorder %s21, 1
    %p44 = por %p42, %p43
    %p46 = scmp.ne.s32.totalorder %s29, %s45
    %p47 = scmp.eq.s32.totalorder %s21, 0
    %p48 = por %p46, %p47
    %s50 = sadd.s32 %s49, 1
    %p53 = scmp.eq.s32.totalorder %s15, 1
    %p54 = scmp.ne.s32.totalorder %s49, %s51
    %p55 = scmp.eq.s32.totalorder %s15, 0
    %p56 = por %p54, %p55
    %p57 = scmp.ne.s32.totalorder %s49, %s51
    %p58 = scmp.eq.s32.totalorder %s20, 1
    %p59 = por %p57, %p58
    %p60 = scmp.ne.s32.totalorder %s51, %s52
    %p61 = scmp.eq.s32.totalorder %s20, 0
    %p62 = por %p60, %p61
    %p63 = scmp.ne.s32.totalorder %s51, %s52
    %p64 = scmp.eq.s32.totalorder %s21, 1
    %p65 = por %p63, %p64
    %p67 = scmp.ne.s32.totalorder %s52, %s66
    %p68 = scmp.eq.s32.totalorder %s21, 0
    %p69 = por %p67, %p68
    %s71 = sadd.s32 %s70, 1
    %p74 = scmp.eq.s32.totalorder %s15, 1
    %p75 = scmp.ne.s32.totalorder %s70, %s72
    %p76 = scmp.eq.s32.totalorder %s15, 0
    %p77 = por %p75, %p76
    %p78 = scmp.ne.s32.totalorder %s70, %s72
    %p79 = scmp.eq.s32.totalorder %s20, 1
    %p80 = por %p78, %p79
    %p81 = scmp.ne.s32.totalorder %s72, %s73
    %p82 = scmp.eq.s32.totalorder %s20, 0
    %p83 = por %p81, %p82
    %p84 = scmp.ne.s32.totalorder %s72, %s73
    %p85 = scmp.eq.s32.totalorder %s21, 1
    %p86 = por %p84, %p85
    %p88 = scmp.ne.s32.totalorder %s73, %s87
    %p89 = scmp.eq.s32.totalorder %s21, 0
    %p90 = por %p88, %p89
    %s92 = sadd.s32 %s91, 1
    %p95 = scmp.eq.s32.totalorder %s15, 1
    %p96 = scmp.ne.s32.totalorder %s91, %s93
    %p97 = scmp.eq.s32.totalorder %s15, 0
    %p98 = por %p96, %p97
    %p99 = scmp.ne.s32.totalorder %s91, %s93
    %p100 = scmp.eq.s32.totalorder %s20, 1
    %p101 = por %p99, %p100
    %p102 = scmp.ne.s32.totalorder %s93, %s94
    %p103 = scmp.eq.s32.totalorder %s20, 0
    %p104 = por %p102, %p103
    %p105 = scmp.ne.s32.totalorder %s93, %s94
    %p106 = scmp.eq.s32.totalorder %s21, 1
    %p107 = por %p105, %p106
    %p109 = scmp.ne.s32.totalorder %s94, %s108
    %p110 = scmp.eq.s32.totalorder %s21, 0
    %p111 = por %p109, %p110
    %s113 = sadd.s32 %s112, 1
    %p116 = scmp.eq.s32.totalorder %s15, 1
    %p117 = scmp.ne.s32.totalorder %s112, %s114
    %p118 = scmp.eq.s32.totalorder %s15, 0
    %p119 = por %p117, %p118
    %p120 = scmp.ne.s32.totalorder %s112, %s114
    %p121 = scmp.eq.s32.totalorder %s20, 1
    %p122 = por %p120, %p121
    %p123 = scmp.ne.s32.totalorder %s114, %s115
    %p124 = scmp.eq.s32.totalorder %s20, 0
    %p125 = por %p123, %p124
    %p126 = scmp.ne.s32.totalorder %s114, %s115
    %p127 = scmp.eq.s32.totalorder %s21, 1
    %p128 = por %p126, %p127
    %p130 = scmp.ne.s32.totalorder %s115, %s129
    %p131 = scmp.eq.s32.totalorder %s21, 0
    %p132 = por %p130, %p131
    %s134 = sadd.s32 %s133, 1
    %p137 = scmp.eq.s32.totalorder %s15, 1
    %p138 = scmp.ne.s32.totalorder %s133, %s135
    %p139 = scmp.eq.s32.totalorder %s15, 0
    %p140 = por %p138, %p139
    %p141 = scmp.ne.s32.totalorder %s133, %s135
    %p142 = scmp.eq.s32.totalorder %s20, 1
    %p143 = por %p141, %p142
    %p144 = scmp.ne.s32.totalorder %s135, %s136
    %p145 = scmp.eq.s32.totalorder %s20, 0
    %p146 = por %p144, %p145
    %p147 = scmp.ne.s32.totalorder %s135, %s136
    %p148 = scmp.eq.s32.totalorder %s21, 1
    %p149 = por %p147, %p148
    %p151 = scmp.ne.s32.totalorder %s136, %s150
    %p152 = scmp.eq.s32.totalorder %s21, 0
    %p153 = por %p151, %p152
    %s155 = sadd.s32 %s154, 1
    %p158 = scmp.eq.s32.totalorder %s15, 1
    %p159 = scmp.ne.s32.totalorder %s154, %s156
    %p160 = scmp.eq.s32.totalorder %s15, 0
    %p161 = por %p159, %p160
    %p162 = scmp.ne.s32.totalorder %s154, %s156
    %p163 = scmp.eq.s32.totalorder %s20, 1
    %p164 = por %p162, %p163
    %p165 = scmp.ne.s32.totalorder %s156, %s157
    %p166 = scmp.eq.s32.totalorder %s20, 0
    %p167 = por %p165, %p166
    %p168 = scmp.ne.s32.totalorder %s156, %s157
    %p169 = scmp.eq.s32.totalorder %s21, 1
    %p170 = por %p168, %p169
    %p172 = scmp.ne.s32.totalorder %s157, %s171
    %p173 = scmp.eq.s32.totalorder %s21, 0
    %p174 = por %p172, %p173
    %s176 = sadd.s32 %s175, 1
    %p179 = scmp.eq.s32.totalorder %s15, 1
    %p180 = scmp.ne.s32.totalorder %s175, %s177
    %p181 = scmp.eq.s32.totalorder %s15, 0
    %p182 = por %p180, %p181
    %p183 = scmp.ne.s32.totalorder %s175, %s177
    %p184 = scmp.eq.s32.totalorder %s20, 1
    %p185 = por %p183, %p184
    %p186 = scmp.ne.s32.totalorder %s177, %s178
    %p187 = scmp.eq.s32.totalorder %s20, 0
    %p188 = por %p186, %p187
    %p189 = scmp.ne.s32.totalorder %s177, %s178
    %p190 = scmp.eq.s32.totalorder %s21, 1
    %p191 = por %p189, %p190
    %p193 = scmp.ne.s32.totalorder %s178, %s192
    %p194 = scmp.eq.s32.totalorder %s21, 0
    %p195 = por %p193, %p194
    %s197 = sadd.s32 %s196, 1
    %p200 = scmp.eq.s32.totalorder %s15, 1
    %p201 = scmp.ne.s32.totalorder %s196, %s198
    %p202 = scmp.eq.s32.totalorder %s15, 0
    %p203 = por %p201, %p202
    %p204 = scmp.ne.s32.totalorder %s196, %s198
    %p205 = scmp.eq.s32.totalorder %s20, 1
    %p206 = por %p204, %p205
    %p207 = scmp.ne.s32.totalorder %s198, %s199
    %p208 = scmp.eq.s32.totalorder %s20, 0
    %p209 = por %p207, %p208
    %p210 = scmp.ne.s32.totalorder %s198, %s199
    %p211 = scmp.eq.s32.totalorder %s21, 1
    %p212 = por %p210, %p211
    %p214 = scmp.ne.s32.totalorder %s199, %s213
    %p215 = scmp.eq.s32.totalorder %s21, 0
    %p216 = por %p214, %p215
    %s217 = ssub.s32 %s15, %s22
    %p218 = scmp.eq.s32.totalorder %s217, 0
    %s220 = sadd.s32 %s219, 1
    %s221 = scalar_select %p218, %s219, %s220
    %p224 = pneg %p218
    %p225 = scmp.eq.s32.totalorder %s15, 1
    %p226 = por %p224, %p225
    %p227 = scmp.ne.s32.totalorder %s219, %s222
    %p228 = scmp.eq.s32.totalorder %s15, 0
    %p229 = por %p227, %p228
    %p230 = scmp.ne.s32.totalorder %s219, %s222
    %p231 = scmp.eq.s32.totalorder %s20, 1
    %p232 = por %p230, %p231
    %p233 = scmp.ne.s32.totalorder %s222, %s223
    %p234 = scmp.eq.s32.totalorder %s20, 0
    %p235 = por %p233, %p234
    %p236 = scmp.ne.s32.totalorder %s222, %s223
    %p237 = scmp.eq.s32.totalorder %s21, 1
    %p238 = por %p236, %p237
    %p240 = scmp.ne.s32.totalorder %s223, %s239
    %p241 = scmp.eq.s32.totalorder %s21, 0
    %p242 = por %p240, %p241
    %p243 = scmp.le.s32.totalorder 1, %s15
    %p244 = scmp.lt.s32.totalorder %s15, 3
    %p245 = pnand %p243, %p244
    %p246 = pneg %p245
    // Predicated region
    $region9: #{tpu_custom_call.1} parent=5 // pred_check
      _
    $region10: #{tpu_custom_call.1} parent=5 // pred_check_branch
      %248 = sbr.rel (%p245) target = $region12
    $region11: #{tpu_custom_call.1} parent=5 // pred_region
      %s249 = ssub.s32 %s15, 1
      // Predicated region
      $region13: #{tpu_custom_call.1} parent=11 // pred_check
        %p250 = pneg %p62
      $region14: #{tpu_custom_call.1} parent=11 // pred_check_branch
        %252 = sbr.rel (%p250) target = $region16
      $region15: #{tpu_custom_call.1} parent=11 // pred_region
        _
      $region16: #{tpu_custom_call.1} parent=11 // pred_fallthru
        _
      // Predicated region
      $region17: #{tpu_custom_call.1} parent=11 // pred_check
        %p253 = pneg %p83
      $region18: #{tpu_custom_call.1} parent=11 // pred_check_branch
        %255 = sbr.rel (%p253) target = $region20
      $region19: #{tpu_custom_call.1} parent=11 // pred_region
        _
      $region20: #{tpu_custom_call.1} parent=11 // pred_fallthru
        _
      // Predicated region
      $region21: #{tpu_custom_call.1} parent=11 // pred_check
        %p256 = pneg %p104
      $region22: #{tpu_custom_call.1} parent=11 // pred_check_branch
        %258 = sbr.rel (%p256) target = $region24
      $region23: #{tpu_custom_call.1} parent=11 // pred_region
        _
      $region24: #{tpu_custom_call.1} parent=11 // pred_fallthru
        _
      // Predicated region
      $region25: #{tpu_custom_call.1} parent=11 // pred_check
        %p259 = pneg %p125
      $region26: #{tpu_custom_call.1} parent=11 // pred_check_branch
        %261 = sbr.rel (%p259) target = $region28
      $region27: #{tpu_custom_call.1} parent=11 // pred_region
        _
      $region28: #{tpu_custom_call.1} parent=11 // pred_fallthru
        _
      // Predicated region
      $region29: #{tpu_custom_call.1} parent=11 // pred_check
        %p262 = pneg %p146
      $region30: #{tpu_custom_call.1} parent=11 // pred_check_branch
        %264 = sbr.rel (%p262) target = $region32
      $region31: #{tpu_custom_call.1} parent=11 // pred_region
        _
      $region32: #{tpu_custom_call.1} parent=11 // pred_fallthru
        _
      // Predicated region
      $region33: #{tpu_custom_call.1} parent=11 // pred_check
        %p265 = pneg %p167
      $region34: #{tpu_custom_call.1} parent=11 // pred_check_branch
        %267 = sbr.rel (%p265) target = $region36
      $region35: #{tpu_custom_call.1} parent=11 // pred_region
        _
      $region36: #{tpu_custom_call.1} parent=11 // pred_fallthru
        _
      // Predicated region
      $region37: #{tpu_custom_call.1} parent=11 // pred_check
        %p268 = pneg %p188
      $region38: #{tpu_custom_call.1} parent=11 // pred_check_branch
        %270 = sbr.rel (%p268) target = $region40
      $region39: #{tpu_custom_call.1} parent=11 // pred_region
        _
      $region40: #{tpu_custom_call.1} parent=11 // pred_fallthru
        _
      // Predicated region
      $region41: #{tpu_custom_call.1} parent=11 // pred_check
        %p271 = pneg %p209
      $region42: #{tpu_custom_call.1} parent=11 // pred_check_branch
        %273 = sbr.rel (%p271) target = $region44
      $region43: #{tpu_custom_call.1} parent=11 // pred_region
        _
      $region44: #{tpu_custom_call.1} parent=11 // pred_fallthru
        _
    $region12: #{tpu_custom_call.1} parent=5 // pred_fallthru
      _
    %p274 = scmp.lt.s32.totalorder %s15, 2
    // Predicated region
    $region45: #{tpu_custom_call.1} parent=5 // pred_check
      %p275 = pneg %p274
    $region46: #{tpu_custom_call.1} parent=5 // pred_check_branch
      %277 = sbr.rel (%p275) target = $region48
    $region47: #{tpu_custom_call.1} parent=5 // pred_region
      // Predicated region
      $region49: #{tpu_custom_call.1} parent=47 // pred_check
        %p278 = pneg %p35
      $region50: #{tpu_custom_call.1} parent=47 // pred_check_branch
        %280 = sbr.rel (%p278) target = $region52
      $region51: #{tpu_custom_call.1} parent=47 // pred_region
        %s281 = smul.u32 16, %s15
        %p282 = scmp.lt.s32.totalorder %s281, 31
        %s283 = scalar_select %p282, %s281, 31
        %s284 = smul.addr %s283, 8
        %s285 = scalar_lea.vmem %s0, %s284
        %s286 = smul.u32 16, %s15
      $region52: #{tpu_custom_call.1} parent=47 // pred_fallthru
        _
    $region48: #{tpu_custom_call.1} parent=5 // pred_fallthru
      _
    %p287 = scmp.le.s32.totalorder 1, %s15
    %p288 = scmp.lt.s32.totalorder %s15, 3
    %p289 = pnand %p287, %p288
    %p290 = pneg %p289
    // Predicated region
    $region53: #{tpu_custom_call.1} parent=5 // pred_check
      _
    $region54: #{tpu_custom_call.1} parent=5 // pred_check_branch
      %292 = sbr.rel (%p289) target = $region56
    $region55: #{tpu_custom_call.1} parent=5 // pred_region
      %s293 = ssub.s32 %s15, 1
      %s294 = smul.u32 16, %s20
      %p295 = scmp.lt.s32.totalorder %s294, 31
      %s296 = scalar_select %p295, %s294, 31
      %s297 = smul.addr %s296, 8
      %s298 = scalar_lea.vmem %s0, %s297
      %p299 = pneg %p41
      %p300 = pneg %p38
      %p301 = pneg %p62
      %p302 = pneg %p59
      %p303 = pneg %p83
      %p304 = pneg %p80
      %p305 = pneg %p104
      %p306 = pneg %p101
      %p307 = pneg %p125
      %p308 = pneg %p122
      %p309 = pneg %p146
      %p310 = pneg %p143
      %p311 = pneg %p167
      %p312 = pneg %p164
      %p313 = pneg %p188
      %p314 = pneg %p185
      %p315 = pneg %p209
      %p316 = pneg %p206
      %p317 = pneg %p235
      %p318 = pneg %p232
      %s319 = smul.u32 16, %s20
      %p320 = scmp.lt.s32.totalorder %s319, 31
      %s321 = scalar_select %p320, %s319, 31
      %s322 = smul.addr %s321, 8
      %s323 = scalar_lea.vmem %s9, %s322
      %s324 = smul.u32 16, %s20
      %p325 = scmp.lt.s32.totalorder %s324, 31
      %s326 = scalar_select %p325, %s324, 31
      %s327 = smul.addr %s326, 8
      %s328 = scalar_lea.vmem %s0, %s327
      %s329 = smul.u32 16, %s20
      %s330 = smul.u32 16, %s20
      %p331 = scmp.lt.s32.totalorder %s330, 31
      %s332 = scalar_select %p331, %s330, 31
      %s333 = smul.addr %s332, 8
      %s334 = scalar_lea.vmem %s9, %s333
      %s335 = smul.u32 16, %s20
      %v336 = vld [vmem:[%s328] sm:$0xff]
      %v337 = vld [vmem:[%s328 + $0x8] sm:$0xff]
      %v338 = vld [vmem:[%s328 + $0x10] sm:$0xff]
      %v339 = vld [vmem:[%s328 + $0x18] sm:$0xff]
      %v340 = vld [vmem:[%s328 + $0x20] sm:$0xff]
      %v341 = vld [vmem:[%s328 + $0x28] sm:$0xff]
      %v342 = vld [vmem:[%s328 + $0x30] sm:$0xff]
      %v343 = vld [vmem:[%s328 + $0x38] sm:$0xff]
      %v344 = vld [vmem:[%s328 + $0x40] sm:$0xff]
      %v345 = vld [vmem:[%s328 + $0x48] sm:$0xff]
      %v346 = vld [vmem:[%s328 + $0x50] sm:$0xff]
      %v347 = vld [vmem:[%s328 + $0x58] sm:$0xff]
      %v348 = vld [vmem:[%s328 + $0x60] sm:$0xff]
      %v349 = vld [vmem:[%s328 + $0x68] sm:$0xff]
      %v350 = vld [vmem:[%s328 + $0x70] sm:$0xff]
      %v351 = vld [vmem:[%s328 + $0x78] sm:$0xff]
      %v352 = vld [vmem:[%s1] sm:$0xff]
      %v353 = vld [vmem:[%s1 + $0x8] sm:$0xff]
      %v354 = vld [vmem:[%s1 + $0x10] sm:$0xff]
      %v355 = vld [vmem:[%s1 + $0x18] sm:$0xff]
      %v356 = vld [vmem:[%s2] sm:$0x1]
      %v358 = vlaneseq
      %v359 = vshrl.u32 %v358, 7
      %v360 = vsub.s32 0, %v359
      %v361 = vrot.slane %v356, %v360
      %vm363 = vcmask 261120
      %v365 = vsel %vm363, %v336, 0
      %v368 = vsel %vm363, %v337, 0
      %v371 = vsel %vm363, %v338, 0
      %v374 = vsel %vm363, %v339, 0
      %v377 = vsel %vm363, %v340, 0
      %v380 = vsel %vm363, %v341, 0
      %v383 = vsel %vm363, %v342, 0
      %v386 = vsel %vm363, %v343, 0
      %v389 = vsel %vm363, %v344, 0
      %v392 = vsel %vm363, %v345, 0
      %v395 = vsel %vm363, %v346, 0
      %v398 = vsel %vm363, %v347, 0
      %v401 = vsel %vm363, %v348, 0
      %v404 = vsel %vm363, %v349, 0
      %v407 = vsel %vm363, %v350, 0
      %v410 = vsel %vm363, %v351, 0
      %412 = vmatprep.subr.mxu0 0.0
      %413 = vmatpush1.msra.mxu0 0.0
      %414 = vmatprep.subr.mxu0 0.0
      %415 = vmatpush1.msra.mxu0 0.0
      %416 = vmatprep.subr.mxu0 0.0
      %417 = vmatpush1.msra.mxu0 0.0
      %418 = vmatprep.subr.mxu0 0.0
      %419 = vmatpush1.msra.mxu0 0.0
      %420 = vmatprep.subr.mxu0 0.0
      %421 = vmatpush1.msra.mxu0 0.0
      %422 = vmatprep.subr.mxu0 0.0
      %423 = vmatpush1.msra.mxu0 0.0
      %424 = vmatprep.subr.mxu0 0.0
      %425 = vmatpush1.msra.mxu0 0.0
      %426 = vmatprep.subr.mxu0 0.0
      %427 = vmatpush1.msra.mxu0 0.0
      %428 = vmatprep.subr.mxu0 0.0
      %429 = vmatpush1.msra.mxu0 0.0
      %430 = vmatprep.subr.mxu0 0.0
      %431 = vmatpush1.msra.mxu0 0.0
      %432 = vmatprep.subr.mxu0 0.0
      %433 = vmatpush1.msra.mxu0 0.0
      %434 = vmatprep.subr.mxu0 0.0
      %435 = vmatpush1.msra.mxu0 0.0
      %436 = vmatprep.subr.mxu0 0.0
      %437 = vmatpush1.msra.mxu0 %v355
      %438 = vmatprep.subr.mxu0 0.0
      %439 = vmatpush1.msra.mxu0 %v354
      %440 = vmatprep.subr.mxu0 0.0
      %441 = vmatpush1.msra.mxu0 %v353
      %442 = vmatprep.subr.mxu0 0.0
      %443 = vmatpush1.msra.mxu0 %v352
      %444 = vmatprep.subr.mxu0 0.0
      %445 = vmatpush2.msra.mxu0 0.0
      %446 = vmatprep.subr.mxu0 0.0
      %447 = vmatpush2.msra.mxu0 0.0
      %448 = vmatprep.subr.mxu0 0.0
      %449 = vmatpush2.msra.mxu0 0.0
      %450 = vmatprep.subr.mxu0 0.0
      %451 = vmatpush2.msra.mxu0 0.0
      %452 = vmatprep.subr.mxu0 0.0
      %453 = vmatpush2.msra.mxu0 0.0
      %454 = vmatprep.subr.mxu0 0.0
      %455 = vmatpush2.msra.mxu0 0.0
      %456 = vmatprep.subr.mxu0 0.0
      %457 = vmatpush2.msra.mxu0 0.0
      %458 = vmatprep.subr.mxu0 0.0
      %459 = vmatpush2.msra.mxu0 0.0
      %460 = vmatprep.subr.mxu0 0.0
      %461 = vmatpush2.msra.mxu0 0.0
      %462 = vmatprep.subr.mxu0 0.0
      %463 = vmatpush2.msra.mxu0 0.0
      %464 = vmatprep.subr.mxu0 0.0
      %465 = vmatpush2.msra.mxu0 0.0
      %466 = vmatprep.subr.mxu0 0.0
      %467 = vmatpush2.msra.mxu0 0.0
      %468 = vmatprep.subr.mxu0 0.0
      %469 = vmatpush2.msra.mxu0 0.0
      %470 = vmatprep.subr.mxu0 0.0
      %471 = vmatpush2.msra.mxu0 0.0
      %472 = vmatprep.subr.mxu0 0.0
      %473 = vmatpush2.msra.mxu0 0.0
      %474 = vmatprep.subr.mxu0 0.0
      %475 = vmatpush2.msra.mxu0 0.0
      %476 = vmatprep.mubr.f32.mxu0 0.0
      %477 = vmatmul.mubr.f32.gmra.mxu0 %v365
      %v478 = vpop.f32.mrf.mxu0
      %v479 = vadd.f32 %v361, %v478
      %v480 = vpop.f32.mrf.mxu0
      %481 = vmatprep.mubr.f32.mxu0 0.0
      %482 = vmatmul.mubr.f32.gmra.mxu0 %v368
      %v483 = vpop.f32.mrf.mxu0
      %v484 = vadd.f32 %v361, %v483
      %v485 = vpop.f32.mrf.mxu0
      %486 = vmatprep.mubr.f32.mxu0 0.0
      %487 = vmatmul.mubr.f32.gmra.mxu0 %v371
      %v488 = vpop.f32.mrf.mxu0
      %v489 = vadd.f32 %v361, %v488
      %v490 = vpop.f32.mrf.mxu0
      %491 = vmatprep.mubr.f32.mxu0 0.0
      %492 = vmatmul.mubr.f32.gmra.mxu0 %v374
      %v493 = vpop.f32.mrf.mxu0
      %v494 = vadd.f32 %v361, %v493
      %v495 = vpop.f32.mrf.mxu0
      %496 = vmatprep.mubr.f32.mxu0 0.0
      %497 = vmatmul.mubr.f32.gmra.mxu0 %v377
      %v498 = vpop.f32.mrf.mxu0
      %v499 = vadd.f32 %v361, %v498
      %v500 = vpop.f32.mrf.mxu0
      %501 = vmatprep.mubr.f32.mxu0 0.0
      %502 = vmatmul.mubr.f32.gmra.mxu0 %v380
      %v503 = vpop.f32.mrf.mxu0
      %v504 = vadd.f32 %v361, %v503
      %v505 = vpop.f32.mrf.mxu0
      %506 = vmatprep.mubr.f32.mxu0 0.0
      %507 = vmatmul.mubr.f32.gmra.mxu0 %v383
      %v508 = vpop.f32.mrf.mxu0
      %v509 = vadd.f32 %v361, %v508
      %v510 = vpop.f32.mrf.mxu0
      %511 = vmatprep.mubr.f32.mxu0 0.0
      %512 = vmatmul.mubr.f32.gmra.mxu0 %v386
      %v513 = vpop.f32.mrf.mxu0
      %v514 = vadd.f32 %v361, %v513
      %v515 = vpop.f32.mrf.mxu0
      %516 = vmatprep.mubr.f32.mxu0 0.0
      %517 = vmatmul.mubr.f32.gmra.mxu0 %v389
      %v518 = vpop.f32.mrf.mxu0
      %v519 = vadd.f32 %v361, %v518
      %v520 = vpop.f32.mrf.mxu0
      %521 = vmatprep.mubr.f32.mxu0 0.0
      %522 = vmatmul.mubr.f32.gmra.mxu0 %v392
      %v523 = vpop.f32.mrf.mxu0
      %v524 = vadd.f32 %v361, %v523
      %v525 = vpop.f32.mrf.mxu0
      %526 = vmatprep.mubr.f32.mxu0 0.0
      %527 = vmatmul.mubr.f32.gmra.mxu0 %v395
      %v528 = vpop.f32.mrf.mxu0
      %v529 = vadd.f32 %v361, %v528
      %v530 = vpop.f32.mrf.mxu0
      %531 = vmatprep.mubr.f32.mxu0 0.0
      %532 = vmatmul.mubr.f32.gmra.mxu0 %v398
      %v533 = vpop.f32.mrf.mxu0
      %v534 = vadd.f32 %v361, %v533
      %v535 = vpop.f32.mrf.mxu0
      %536 = vmatprep.mubr.f32.mxu0 0.0
      %537 = vmatmul.mubr.f32.gmra.mxu0 %v401
      %v538 = vpop.f32.mrf.mxu0
      %v539 = vadd.f32 %v361, %v538
      %v540 = vpop.f32.mrf.mxu0
      %541 = vmatprep.mubr.f32.mxu0 0.0
      %542 = vmatmul.mubr.f32.gmra.mxu0 %v404
      %v543 = vpop.f32.mrf.mxu0
      %v544 = vadd.f32 %v361, %v543
      %v545 = vpop.f32.mrf.mxu0
      %546 = vmatprep.mubr.f32.mxu0 0.0
      %547 = vmatmul.mubr.f32.gmra.mxu0 %v407
      %v548 = vpop.f32.mrf.mxu0
      %v549 = vadd.f32 %v361, %v548
      %v550 = vpop.f32.mrf.mxu0
      %551 = vmatprep.mubr.f32.mxu0 0.0
      %552 = vmatmul.mubr.f32.gmra.mxu0 %v410
      %v553 = vpop.f32.mrf.mxu0
      %v554 = vadd.f32 %v361, %v553
      %v555 = vpop.f32.mrf.mxu0
      %556 = vdwg.mxu0
      %v557 = vmax.f32 %v479, 0.0
      %v558 = vmax.f32 %v484, 0.0
      %v559 = vmax.f32 %v489, 0.0
      %v560 = vmax.f32 %v494, 0.0
      %v561 = vmax.f32 %v499, 0.0
      %v562 = vmax.f32 %v504, 0.0
      %v563 = vmax.f32 %v509, 0.0
      %v564 = vmax.f32 %v514, 0.0
      %v565 = vmax.f32 %v519, 0.0
      %v566 = vmax.f32 %v524, 0.0
      %v567 = vmax.f32 %v529, 0.0
      %v568 = vmax.f32 %v534, 0.0
      %v569 = vmax.f32 %v539, 0.0
      %v570 = vmax.f32 %v544, 0.0
      %v571 = vmax.f32 %v549, 0.0
      %v572 = vmax.f32 %v554, 0.0
      %v573 = vld [vmem:[%s3] sm:$0xff]
      %v574 = vld [vmem:[%s3 + $0x8] sm:$0xff]
      %v575 = vld [vmem:[%s3 + $0x10] sm:$0xff]
      %v576 = vld [vmem:[%s3 + $0x18] sm:$0xff]
      %v577 = vld [vmem:[%s3 + $0x20] sm:$0xff]
      %v578 = vld [vmem:[%s3 + $0x28] sm:$0xff]
      %v579 = vld [vmem:[%s3 + $0x30] sm:$0xff]
      %v580 = vld [vmem:[%s3 + $0x38] sm:$0xff]
      %v581 = vld [vmem:[%s3 + $0x40] sm:$0xff]
      %v582 = vld [vmem:[%s3 + $0x48] sm:$0xff]
      %v583 = vld [vmem:[%s3 + $0x50] sm:$0xff]
      %v584 = vld [vmem:[%s3 + $0x58] sm:$0xff]
      %v585 = vld [vmem:[%s3 + $0x60] sm:$0xff]
      %v586 = vld [vmem:[%s3 + $0x68] sm:$0xff]
      %v587 = vld [vmem:[%s3 + $0x70] sm:$0xff]
      %v588 = vld [vmem:[%s3 + $0x78] sm:$0xff]
      %v589 = vld [vmem:[%s4] sm:$0x1]
      %v591 = vlaneseq
      %v592 = vshrl.u32 %v591, 7
      %v593 = vsub.s32 0, %v592
      %v594 = vrot.slane %v589, %v593
      %596 = vmatprep.subr.mxu0 0.0
      %597 = vmatpush1.msra.mxu0 %v588
      %598 = vmatprep.subr.mxu0 0.0
      %599 = vmatpush1.msra.mxu0 %v587
      %600 = vmatprep.subr.mxu0 0.0
      %601 = vmatpush1.msra.mxu0 %v586
      %602 = vmatprep.subr.mxu0 0.0
      %603 = vmatpush1.msra.mxu0 %v585
      %604 = vmatprep.subr.mxu0 0.0
      %605 = vmatpush1.msra.mxu0 %v584
      %606 = vmatprep.subr.mxu0 0.0
      %607 = vmatpush1.msra.mxu0 %v583
      %608 = vmatprep.subr.mxu0 0.0
      %609 = vmatpush1.msra.mxu0 %v582
      %610 = vmatprep.subr.mxu0 0.0
      %611 = vmatpush1.msra.mxu0 %v581
      %612 = vmatprep.subr.mxu0 0.0
      %613 = vmatpush1.msra.mxu0 %v580
      %614 = vmatprep.subr.mxu0 0.0
      %615 = vmatpush1.msra.mxu0 %v579
      %616 = vmatprep.subr.mxu0 0.0
      %617 = vmatpush1.msra.mxu0 %v578
      %618 = vmatprep.subr.mxu0 0.0
      %619 = vmatpush1.msra.mxu0 %v577
      %620 = vmatprep.subr.mxu0 0.0
      %621 = vmatpush1.msra.mxu0 %v576
      %622 = vmatprep.subr.mxu0 0.0
      %623 = vmatpush1.msra.mxu0 %v575
      %624 = vmatprep.subr.mxu0 0.0
      %625 = vmatpush1.msra.mxu0 %v574
      %626 = vmatprep.subr.mxu0 0.0
      %627 = vmatpush1.msra.mxu0 %v573
      %628 = vmatprep.subr.mxu0 0.0
      %629 = vmatpush2.msra.mxu0 0.0
      %630 = vmatprep.subr.mxu0 0.0
      %631 = vmatpush2.msra.mxu0 0.0
      %632 = vmatprep.subr.mxu0 0.0
      %633 = vmatpush2.msra.mxu0 0.0
      %634 = vmatprep.subr.mxu0 0.0
      %635 = vmatpush2.msra.mxu0 0.0
      %636 = vmatprep.subr.mxu0 0.0
      %637 = vmatpush2.msra.mxu0 0.0
      %638 = vmatprep.subr.mxu0 0.0
      %639 = vmatpush2.msra.mxu0 0.0
      %640 = vmatprep.subr.mxu0 0.0
      %641 = vmatpush2.msra.mxu0 0.0
      %642 = vmatprep.subr.mxu0 0.0
      %643 = vmatpush2.msra.mxu0 0.0
      %644 = vmatprep.subr.mxu0 0.0
      %645 = vmatpush2.msra.mxu0 0.0
      %646 = vmatprep.subr.mxu0 0.0
      %647 = vmatpush2.msra.mxu0 0.0
      %648 = vmatprep.subr.mxu0 0.0
      %649 = vmatpush2.msra.mxu0 0.0
      %650 = vmatprep.subr.mxu0 0.0
      %651 = vmatpush2.msra.mxu0 0.0
      %652 = vmatprep.subr.mxu0 0.0
      %653 = vmatpush2.msra.mxu0 0.0
      %654 = vmatprep.subr.mxu0 0.0
      %655 = vmatpush2.msra.mxu0 0.0
      %656 = vmatprep.subr.mxu0 0.0
      %657 = vmatpush2.msra.mxu0 0.0
      %658 = vmatprep.subr.mxu0 0.0
      %659 = vmatpush2.msra.mxu0 0.0
      %660 = vmatprep.mubr.f32.mxu0 0.0
      %661 = vmatmul.mubr.f32.gmra.mxu0 %v557
      %v662 = vpop.f32.mrf.mxu0
      %v663 = vadd.f32 %v594, %v662
      %v664 = vpop.f32.mrf.mxu0
      %665 = vmatprep.mubr.f32.mxu0 0.0
      %666 = vmatmul.mubr.f32.gmra.mxu0 %v558
      %v667 = vpop.f32.mrf.mxu0
      %v668 = vadd.f32 %v594, %v667
      %v669 = vpop.f32.mrf.mxu0
      %670 = vmatprep.mubr.f32.mxu0 0.0
      %671 = vmatmul.mubr.f32.gmra.mxu0 %v559
      %v672 = vpop.f32.mrf.mxu0
      %v673 = vadd.f32 %v594, %v672
      %v674 = vpop.f32.mrf.mxu0
      %675 = vmatprep.mubr.f32.mxu0 0.0
      %676 = vmatmul.mubr.f32.gmra.mxu0 %v560
      %v677 = vpop.f32.mrf.mxu0
      %v678 = vadd.f32 %v594, %v677
      %v679 = vpop.f32.mrf.mxu0
      %680 = vmatprep.mubr.f32.mxu0 0.0
      %681 = vmatmul.mubr.f32.gmra.mxu0 %v561
      %v682 = vpop.f32.mrf.mxu0
      %v683 = vadd.f32 %v594, %v682
      %v684 = vpop.f32.mrf.mxu0
      %685 = vmatprep.mubr.f32.mxu0 0.0
      %686 = vmatmul.mubr.f32.gmra.mxu0 %v562
      %v687 = vpop.f32.mrf.mxu0
      %v688 = vadd.f32 %v594, %v687
      %v689 = vpop.f32.mrf.mxu0
      %690 = vmatprep.mubr.f32.mxu0 0.0
      %691 = vmatmul.mubr.f32.gmra.mxu0 %v563
      %v692 = vpop.f32.mrf.mxu0
      %v693 = vadd.f32 %v594, %v692
      %v694 = vpop.f32.mrf.mxu0
      %695 = vmatprep.mubr.f32.mxu0 0.0
      %696 = vmatmul.mubr.f32.gmra.mxu0 %v564
      %v697 = vpop.f32.mrf.mxu0
      %v698 = vadd.f32 %v594, %v697
      %v699 = vpop.f32.mrf.mxu0
      %700 = vmatprep.mubr.f32.mxu0 0.0
      %701 = vmatmul.mubr.f32.gmra.mxu0 %v565
      %v702 = vpop.f32.mrf.mxu0
      %v703 = vadd.f32 %v594, %v702
      %v704 = vpop.f32.mrf.mxu0
      %705 = vmatprep.mubr.f32.mxu0 0.0
      %706 = vmatmul.mubr.f32.gmra.mxu0 %v566
      %v707 = vpop.f32.mrf.mxu0
      %v708 = vadd.f32 %v594, %v707
      %v709 = vpop.f32.mrf.mxu0
      %710 = vmatprep.mubr.f32.mxu0 0.0
      %711 = vmatmul.mubr.f32.gmra.mxu0 %v567
      %v712 = vpop.f32.mrf.mxu0
      %v713 = vadd.f32 %v594, %v712
      %v714 = vpop.f32.mrf.mxu0
      %715 = vmatprep.mubr.f32.mxu0 0.0
      %716 = vmatmul.mubr.f32.gmra.mxu0 %v568
      %v717 = vpop.f32.mrf.mxu0
      %v718 = vadd.f32 %v594, %v717
      %v719 = vpop.f32.mrf.mxu0
      %720 = vmatprep.mubr.f32.mxu0 0.0
      %721 = vmatmul.mubr.f32.gmra.mxu0 %v569
      %v722 = vpop.f32.mrf.mxu0
      %v723 = vadd.f32 %v594, %v722
      %v724 = vpop.f32.mrf.mxu0
      %725 = vmatprep.mubr.f32.mxu0 0.0
      %726 = vmatmul.mubr.f32.gmra.mxu0 %v570
      %v727 = vpop.f32.mrf.mxu0
      %v728 = vadd.f32 %v594, %v727
      %v729 = vpop.f32.mrf.mxu0
      %730 = vmatprep.mubr.f32.mxu0 0.0
      %731 = vmatmul.mubr.f32.gmra.mxu0 %v571
      %v732 = vpop.f32.mrf.mxu0
      %v733 = vadd.f32 %v594, %v732
      %v734 = vpop.f32.mrf.mxu0
      %735 = vmatprep.mubr.f32.mxu0 0.0
      %736 = vmatmul.mubr.f32.gmra.mxu0 %v572
      %v737 = vpop.f32.mrf.mxu0
      %v738 = vadd.f32 %v594, %v737
      %v739 = vpop.f32.mrf.mxu0
      %740 = vdwg.mxu0
      %v741 = vmax.f32 %v663, 0.0
      %v742 = vmax.f32 %v668, 0.0
      %v743 = vmax.f32 %v673, 0.0
      %v744 = vmax.f32 %v678, 0.0
      %v745 = vmax.f32 %v683, 0.0
      %v746 = vmax.f32 %v688, 0.0
      %v747 = vmax.f32 %v693, 0.0
      %v748 = vmax.f32 %v698, 0.0
      %v749 = vmax.f32 %v703, 0.0
      %v750 = vmax.f32 %v708, 0.0
      %v751 = vmax.f32 %v713, 0.0
      %v752 = vmax.f32 %v718, 0.0
      %v753 = vmax.f32 %v723, 0.0
      %v754 = vmax.f32 %v728, 0.0
      %v755 = vmax.f32 %v733, 0.0
      %v756 = vmax.f32 %v738, 0.0
      %v757 = vld [vmem:[%s5] sm:$0xff]
      %v758 = vld [vmem:[%s5 + $0x8] sm:$0xff]
      %v759 = vld [vmem:[%s5 + $0x10] sm:$0xff]
      %v760 = vld [vmem:[%s5 + $0x18] sm:$0xff]
      %v761 = vld [vmem:[%s5 + $0x20] sm:$0xff]
      %v762 = vld [vmem:[%s5 + $0x28] sm:$0xff]
      %v763 = vld [vmem:[%s5 + $0x30] sm:$0xff]
      %v764 = vld [vmem:[%s5 + $0x38] sm:$0xff]
      %v765 = vld [vmem:[%s5 + $0x40] sm:$0xff]
      %v766 = vld [vmem:[%s5 + $0x48] sm:$0xff]
      %v767 = vld [vmem:[%s5 + $0x50] sm:$0xff]
      %v768 = vld [vmem:[%s5 + $0x58] sm:$0xff]
      %v769 = vld [vmem:[%s5 + $0x60] sm:$0xff]
      %v770 = vld [vmem:[%s5 + $0x68] sm:$0xff]
      %v771 = vld [vmem:[%s5 + $0x70] sm:$0xff]
      %v772 = vld [vmem:[%s5 + $0x78] sm:$0xff]
      %v773 = vld [vmem:[%s6] sm:$0x1]
      %v775 = vlaneseq
      %v776 = vshrl.u32 %v775, 7
      %v777 = vsub.s32 0, %v776
      %v778 = vrot.slane %v773, %v777
      %780 = vmatprep.subr.mxu0 0.0
      %781 = vmatpush1.msra.mxu0 %v772
      %782 = vmatprep.subr.mxu0 0.0
      %783 = vmatpush1.msra.mxu0 %v771
      %784 = vmatprep.subr.mxu0 0.0
      %785 = vmatpush1.msra.mxu0 %v770
      %786 = vmatprep.subr.mxu0 0.0
      %787 = vmatpush1.msra.mxu0 %v769
      %788 = vmatprep.subr.mxu0 0.0
      %789 = vmatpush1.msra.mxu0 %v768
      %790 = vmatprep.subr.mxu0 0.0
      %791 = vmatpush1.msra.mxu0 %v767
      %792 = vmatprep.subr.mxu0 0.0
      %793 = vmatpush1.msra.mxu0 %v766
      %794 = vmatprep.subr.mxu0 0.0
      %795 = vmatpush1.msra.mxu0 %v765
      %796 = vmatprep.subr.mxu0 0.0
      %797 = vmatpush1.msra.mxu0 %v764
      %798 = vmatprep.subr.mxu0 0.0
      %799 = vmatpush1.msra.mxu0 %v763
      %800 = vmatprep.subr.mxu0 0.0
      %801 = vmatpush1.msra.mxu0 %v762
      %802 = vmatprep.subr.mxu0 0.0
      %803 = vmatpush1.msra.mxu0 %v761
      %804 = vmatprep.subr.mxu0 0.0
      %805 = vmatpush1.msra.mxu0 %v760
      %806 = vmatprep.subr.mxu0 0.0
      %807 = vmatpush1.msra.mxu0 %v759
      %808 = vmatprep.subr.mxu0 0.0
      %809 = vmatpush1.msra.mxu0 %v758
      %810 = vmatprep.subr.mxu0 0.0
      %811 = vmatpush1.msra.mxu0 %v757
      %812 = vmatprep.subr.mxu0 0.0
      %813 = vmatpush2.msra.mxu0 0.0
      %814 = vmatprep.subr.mxu0 0.0
      %815 = vmatpush2.msra.mxu0 0.0
      %816 = vmatprep.subr.mxu0 0.0
      %817 = vmatpush2.msra.mxu0 0.0
      %818 = vmatprep.subr.mxu0 0.0
      %819 = vmatpush2.msra.mxu0 0.0
      %820 = vmatprep.subr.mxu0 0.0
      %821 = vmatpush2.msra.mxu0 0.0
      %822 = vmatprep.subr.mxu0 0.0
      %823 = vmatpush2.msra.mxu0 0.0
      %824 = vmatprep.subr.mxu0 0.0
      %825 = vmatpush2.msra.mxu0 0.0
      %826 = vmatprep.subr.mxu0 0.0
      %827 = vmatpush2.msra.mxu0 0.0
      %828 = vmatprep.subr.mxu0 0.0
      %829 = vmatpush2.msra.mxu0 0.0
      %830 = vmatprep.subr.mxu0 0.0
      %831 = vmatpush2.msra.mxu0 0.0
      %832 = vmatprep.subr.mxu0 0.0
      %833 = vmatpush2.msra.mxu0 0.0
      %834 = vmatprep.subr.mxu0 0.0
      %835 = vmatpush2.msra.mxu0 0.0
      %836 = vmatprep.subr.mxu0 0.0
      %837 = vmatpush2.msra.mxu0 0.0
      %838 = vmatprep.subr.mxu0 0.0
      %839 = vmatpush2.msra.mxu0 0.0
      %840 = vmatprep.subr.mxu0 0.0
      %841 = vmatpush2.msra.mxu0 0.0
      %842 = vmatprep.subr.mxu0 0.0
      %843 = vmatpush2.msra.mxu0 0.0
      %844 = vmatprep.mubr.f32.mxu0 0.0
      %845 = vmatmul.mubr.f32.gmra.mxu0 %v741
      %v846 = vpop.f32.mrf.mxu0
      %v847 = vadd.f32 %v778, %v846
      %v848 = vpop.f32.mrf.mxu0
      %849 = vmatprep.mubr.f32.mxu0 0.0
      %850 = vmatmul.mubr.f32.gmra.mxu0 %v742
      %v851 = vpop.f32.mrf.mxu0
      %v852 = vadd.f32 %v778, %v851
      %v853 = vpop.f32.mrf.mxu0
      %854 = vmatprep.mubr.f32.mxu0 0.0
      %855 = vmatmul.mubr.f32.gmra.mxu0 %v743
      %v856 = vpop.f32.mrf.mxu0
      %v857 = vadd.f32 %v778, %v856
      %v858 = vpop.f32.mrf.mxu0
      %859 = vmatprep.mubr.f32.mxu0 0.0
      %860 = vmatmul.mubr.f32.gmra.mxu0 %v744
      %v861 = vpop.f32.mrf.mxu0
      %v862 = vadd.f32 %v778, %v861
      %v863 = vpop.f32.mrf.mxu0
      %864 = vmatprep.mubr.f32.mxu0 0.0
      %865 = vmatmul.mubr.f32.gmra.mxu0 %v745
      %v866 = vpop.f32.mrf.mxu0
      %v867 = vadd.f32 %v778, %v866
      %v868 = vpop.f32.mrf.mxu0
      %869 = vmatprep.mubr.f32.mxu0 0.0
      %870 = vmatmul.mubr.f32.gmra.mxu0 %v746
      %v871 = vpop.f32.mrf.mxu0
      %v872 = vadd.f32 %v778, %v871
      %v873 = vpop.f32.mrf.mxu0
      %874 = vmatprep.mubr.f32.mxu0 0.0
      %875 = vmatmul.mubr.f32.gmra.mxu0 %v747
      %v876 = vpop.f32.mrf.mxu0
      %v877 = vadd.f32 %v778, %v876
      %v878 = vpop.f32.mrf.mxu0
      %879 = vmatprep.mubr.f32.mxu0 0.0
      %880 = vmatmul.mubr.f32.gmra.mxu0 %v748
      %v881 = vpop.f32.mrf.mxu0
      %v882 = vadd.f32 %v778, %v881
      %v883 = vpop.f32.mrf.mxu0
      %884 = vmatprep.mubr.f32.mxu0 0.0
      %885 = vmatmul.mubr.f32.gmra.mxu0 %v749
      %v886 = vpop.f32.mrf.mxu0
      %v887 = vadd.f32 %v778, %v886
      %v888 = vpop.f32.mrf.mxu0
      %889 = vmatprep.mubr.f32.mxu0 0.0
      %890 = vmatmul.mubr.f32.gmra.mxu0 %v750
      %v891 = vpop.f32.mrf.mxu0
      %v892 = vadd.f32 %v778, %v891
      %v893 = vpop.f32.mrf.mxu0
      %894 = vmatprep.mubr.f32.mxu0 0.0
      %895 = vmatmul.mubr.f32.gmra.mxu0 %v751
      %v896 = vpop.f32.mrf.mxu0
      %v897 = vadd.f32 %v778, %v896
      %v898 = vpop.f32.mrf.mxu0
      %899 = vmatprep.mubr.f32.mxu0 0.0
      %900 = vmatmul.mubr.f32.gmra.mxu0 %v752
      %v901 = vpop.f32.mrf.mxu0
      %v902 = vadd.f32 %v778, %v901
      %v903 = vpop.f32.mrf.mxu0
      %904 = vmatprep.mubr.f32.mxu0 0.0
      %905 = vmatmul.mubr.f32.gmra.mxu0 %v753
      %v906 = vpop.f32.mrf.mxu0
      %v907 = vadd.f32 %v778, %v906
      %v908 = vpop.f32.mrf.mxu0
      %909 = vmatprep.mubr.f32.mxu0 0.0
      %910 = vmatmul.mubr.f32.gmra.mxu0 %v754
      %v911 = vpop.f32.mrf.mxu0
      %v912 = vadd.f32 %v778, %v911
      %v913 = vpop.f32.mrf.mxu0
      %914 = vmatprep.mubr.f32.mxu0 0.0
      %915 = vmatmul.mubr.f32.gmra.mxu0 %v755
      %v916 = vpop.f32.mrf.mxu0
      %v917 = vadd.f32 %v778, %v916
      %v918 = vpop.f32.mrf.mxu0
      %919 = vmatprep.mubr.f32.mxu0 0.0
      %920 = vmatmul.mubr.f32.gmra.mxu0 %v756
      %v921 = vpop.f32.mrf.mxu0
      %v922 = vadd.f32 %v778, %v921
      %v923 = vpop.f32.mrf.mxu0
      %924 = vdwg.mxu0
      %v925 = vmax.f32 %v847, 0.0
      %v926 = vmax.f32 %v852, 0.0
      %v927 = vmax.f32 %v857, 0.0
      %v928 = vmax.f32 %v862, 0.0
      %v929 = vmax.f32 %v867, 0.0
      %v930 = vmax.f32 %v872, 0.0
      %v931 = vmax.f32 %v877, 0.0
      %v932 = vmax.f32 %v882, 0.0
      %v933 = vmax.f32 %v887, 0.0
      %v934 = vmax.f32 %v892, 0.0
      %v935 = vmax.f32 %v897, 0.0
      %v936 = vmax.f32 %v902, 0.0
      %v937 = vmax.f32 %v907, 0.0
      %v938 = vmax.f32 %v912, 0.0
      %v939 = vmax.f32 %v917, 0.0
      %v940 = vmax.f32 %v922, 0.0
      %v941 = vld [vmem:[%s7] sm:$0xff]
      %v942 = vld [vmem:[%s7 + $0x8] sm:$0xff]
      %v943 = vld [vmem:[%s7 + $0x10] sm:$0xff]
      %v944 = vld [vmem:[%s7 + $0x18] sm:$0xff]
      %v945 = vld [vmem:[%s7 + $0x20] sm:$0xff]
      %v946 = vld [vmem:[%s7 + $0x28] sm:$0xff]
      %v947 = vld [vmem:[%s7 + $0x30] sm:$0xff]
      %v948 = vld [vmem:[%s7 + $0x38] sm:$0xff]
      %v949 = vld [vmem:[%s7 + $0x40] sm:$0xff]
      %v950 = vld [vmem:[%s7 + $0x48] sm:$0xff]
      %v951 = vld [vmem:[%s7 + $0x50] sm:$0xff]
      %v952 = vld [vmem:[%s7 + $0x58] sm:$0xff]
      %v953 = vld [vmem:[%s7 + $0x60] sm:$0xff]
      %v954 = vld [vmem:[%s7 + $0x68] sm:$0xff]
      %v955 = vld [vmem:[%s7 + $0x70] sm:$0xff]
      %v956 = vld [vmem:[%s7 + $0x78] sm:$0xff]
      %v957 = vld [vmem:[%s8] sm:$0x1]
      %v959 = vlaneseq
      %v960 = vshrl.u32 %v959, 7
      %v961 = vsub.s32 0, %v960
      %v962 = vrot.slane %v957, %v961
      %964 = vmatprep.subr.mxu0 0.0
      %965 = vmatpush1.msra.mxu0 %v956
      %966 = vmatprep.subr.mxu0 0.0
      %967 = vmatpush1.msra.mxu0 %v955
      %968 = vmatprep.subr.mxu0 0.0
      %969 = vmatpush1.msra.mxu0 %v954
      %970 = vmatprep.subr.mxu0 0.0
      %971 = vmatpush1.msra.mxu0 %v953
      %972 = vmatprep.subr.mxu0 0.0
      %973 = vmatpush1.msra.mxu0 %v952
      %974 = vmatprep.subr.mxu0 0.0
      %975 = vmatpush1.msra.mxu0 %v951
      %976 = vmatprep.subr.mxu0 0.0
      %977 = vmatpush1.msra.mxu0 %v950
      %978 = vmatprep.subr.mxu0 0.0
      %979 = vmatpush1.msra.mxu0 %v949
      %980 = vmatprep.subr.mxu0 0.0
      %981 = vmatpush1.msra.mxu0 %v948
      %982 = vmatprep.subr.mxu0 0.0
      %983 = vmatpush1.msra.mxu0 %v947
      %984 = vmatprep.subr.mxu0 0.0
      %985 = vmatpush1.msra.mxu0 %v946
      %986 = vmatprep.subr.mxu0 0.0
      %987 = vmatpush1.msra.mxu0 %v945
      %988 = vmatprep.subr.mxu0 0.0
      %989 = vmatpush1.msra.mxu0 %v944
      %990 = vmatprep.subr.mxu0 0.0
      %991 = vmatpush1.msra.mxu0 %v943
      %992 = vmatprep.subr.mxu0 0.0
      %993 = vmatpush1.msra.mxu0 %v942
      %994 = vmatprep.subr.mxu0 0.0
      %995 = vmatpush1.msra.mxu0 %v941
      %996 = vmatprep.subr.mxu0 0.0
      %997 = vmatpush2.msra.mxu0 0.0
      %998 = vmatprep.subr.mxu0 0.0
      %999 = vmatpush2.msra.mxu0 0.0
      %1000 = vmatprep.subr.mxu0 0.0
      %1001 = vmatpush2.msra.mxu0 0.0
      %1002 = vmatprep.subr.mxu0 0.0
      %1003 = vmatpush2.msra.mxu0 0.0
      %1004 = vmatprep.subr.mxu0 0.0
      %1005 = vmatpush2.msra.mxu0 0.0
      %1006 = vmatprep.subr.mxu0 0.0
      %1007 = vmatpush2.msra.mxu0 0.0
      %1008 = vmatprep.subr.mxu0 0.0
      %1009 = vmatpush2.msra.mxu0 0.0
      %1010 = vmatprep.subr.mxu0 0.0
      %1011 = vmatpush2.msra.mxu0 0.0
      %1012 = vmatprep.subr.mxu0 0.0
      %1013 = vmatpush2.msra.mxu0 0.0
      %1014 = vmatprep.subr.mxu0 0.0
      %1015 = vmatpush2.msra.mxu0 0.0
      %1016 = vmatprep.subr.mxu0 0.0
      %1017 = vmatpush2.msra.mxu0 0.0
      %1018 = vmatprep.subr.mxu0 0.0
      %1019 = vmatpush2.msra.mxu0 0.0
      %1020 = vmatprep.subr.mxu0 0.0
      %1021 = vmatpush2.msra.mxu0 0.0
      %1022 = vmatprep.subr.mxu0 0.0
      %1023 = vmatpush2.msra.mxu0 0.0
      %1024 = vmatprep.subr.mxu0 0.0
      %1025 = vmatpush2.msra.mxu0 0.0
      %1026 = vmatprep.subr.mxu0 0.0
      %1027 = vmatpush2.msra.mxu0 0.0
      %1028 = vmatprep.mubr.f32.mxu0 0.0
      %1029 = vmatmul.mubr.f32.gmra.mxu0 %v925
      %v1030 = vpop.f32.mrf.mxu0
      %v1031 = vadd.f32 %v962, %v1030
      %v1032 = vpop.f32.mrf.mxu0
      %1033 = vmatprep.mubr.f32.mxu0 0.0
      %1034 = vmatmul.mubr.f32.gmra.mxu0 %v926
      %v1035 = vpop.f32.mrf.mxu0
      %v1036 = vadd.f32 %v962, %v1035
      %v1037 = vpop.f32.mrf.mxu0
      %1038 = vmatprep.mubr.f32.mxu0 0.0
      %1039 = vmatmul.mubr.f32.gmra.mxu0 %v927
      %v1040 = vpop.f32.mrf.mxu0
      %v1041 = vadd.f32 %v962, %v1040
      %v1042 = vpop.f32.mrf.mxu0
      %1043 = vmatprep.mubr.f32.mxu0 0.0
      %1044 = vmatmul.mubr.f32.gmra.mxu0 %v928
      %v1045 = vpop.f32.mrf.mxu0
      %v1046 = vadd.f32 %v962, %v1045
      %v1047 = vpop.f32.mrf.mxu0
      %1048 = vmatprep.mubr.f32.mxu0 0.0
      %1049 = vmatmul.mubr.f32.gmra.mxu0 %v929
      %v1050 = vpop.f32.mrf.mxu0
      %v1051 = vadd.f32 %v962, %v1050
      %v1052 = vpop.f32.mrf.mxu0
      %1053 = vmatprep.mubr.f32.mxu0 0.0
      %1054 = vmatmul.mubr.f32.gmra.mxu0 %v930
      %v1055 = vpop.f32.mrf.mxu0
      %v1056 = vadd.f32 %v962, %v1055
      %v1057 = vpop.f32.mrf.mxu0
      %1058 = vmatprep.mubr.f32.mxu0 0.0
      %1059 = vmatmul.mubr.f32.gmra.mxu0 %v931
      %v1060 = vpop.f32.mrf.mxu0
      %v1061 = vadd.f32 %v962, %v1060
      %v1062 = vpop.f32.mrf.mxu0
      %1063 = vmatprep.mubr.f32.mxu0 0.0
      %1064 = vmatmul.mubr.f32.gmra.mxu0 %v932
      %v1065 = vpop.f32.mrf.mxu0
      %v1066 = vadd.f32 %v962, %v1065
      %v1067 = vpop.f32.mrf.mxu0
      %1068 = vmatprep.mubr.f32.mxu0 0.0
      %1069 = vmatmul.mubr.f32.gmra.mxu0 %v933
      %v1070 = vpop.f32.mrf.mxu0
      %v1071 = vadd.f32 %v962, %v1070
      %v1072 = vpop.f32.mrf.mxu0
      %1073 = vmatprep.mubr.f32.mxu0 0.0
      %1074 = vmatmul.mubr.f32.gmra.mxu0 %v934
      %v1075 = vpop.f32.mrf.mxu0
      %v1076 = vadd.f32 %v962, %v1075
      %v1077 = vpop.f32.mrf.mxu0
      %1078 = vmatprep.mubr.f32.mxu0 0.0
      %1079 = vmatmul.mubr.f32.gmra.mxu0 %v935
      %v1080 = vpop.f32.mrf.mxu0
      %v1081 = vadd.f32 %v962, %v1080
      %v1082 = vpop.f32.mrf.mxu0
      %1083 = vmatprep.mubr.f32.mxu0 0.0
      %1084 = vmatmul.mubr.f32.gmra.mxu0 %v936
      %v1085 = vpop.f32.mrf.mxu0
      %v1086 = vadd.f32 %v962, %v1085
      %v1087 = vpop.f32.mrf.mxu0
      %1088 = vmatprep.mubr.f32.mxu0 0.0
      %1089 = vmatmul.mubr.f32.gmra.mxu0 %v937
      %v1090 = vpop.f32.mrf.mxu0
      %v1091 = vadd.f32 %v962, %v1090
      %v1092 = vpop.f32.mrf.mxu0
      %1093 = vmatprep.mubr.f32.mxu0 0.0
      %1094 = vmatmul.mubr.f32.gmra.mxu0 %v938
      %v1095 = vpop.f32.mrf.mxu0
      %v1096 = vadd.f32 %v962, %v1095
      %v1097 = vpop.f32.mrf.mxu0
      %1098 = vmatprep.mubr.f32.mxu0 0.0
      %1099 = vmatmul.mubr.f32.gmra.mxu0 %v939
      %v1100 = vpop.f32.mrf.mxu0
      %v1101 = vadd.f32 %v962, %v1100
      %v1102 = vpop.f32.mrf.mxu0
      %1103 = vmatprep.mubr.f32.mxu0 0.0
      %1104 = vmatmul.mubr.f32.gmra.mxu0 %v940
      %v1105 = vpop.f32.mrf.mxu0
      %v1106 = vadd.f32 %v962, %v1105
      %v1107 = vpop.f32.mrf.mxu0
      %1108 = vdwg.mxu0
      %1109 = vst.msk [vmem:[%s334] sm:$0xff] %vm363, %v1031
      %1110 = vst.msk [vmem:[%s334 + $0x8] sm:$0xff] %vm363, %v1036
      %1111 = vst.msk [vmem:[%s334 + $0x10] sm:$0xff] %vm363, %v1041
      %1112 = vst.msk [vmem:[%s334 + $0x18] sm:$0xff] %vm363, %v1046
      %1113 = vst.msk [vmem:[%s334 + $0x20] sm:$0xff] %vm363, %v1051
      %1114 = vst.msk [vmem:[%s334 + $0x28] sm:$0xff] %vm363, %v1056
      %1115 = vst.msk [vmem:[%s334 + $0x30] sm:$0xff] %vm363, %v1061
      %1116 = vst.msk [vmem:[%s334 + $0x38] sm:$0xff] %vm363, %v1066
      %1117 = vst.msk [vmem:[%s334 + $0x40] sm:$0xff] %vm363, %v1071
      %1118 = vst.msk [vmem:[%s334 + $0x48] sm:$0xff] %vm363, %v1076
      %1119 = vst.msk [vmem:[%s334 + $0x50] sm:$0xff] %vm363, %v1081
      %1120 = vst.msk [vmem:[%s334 + $0x58] sm:$0xff] %vm363, %v1086
      %1121 = vst.msk [vmem:[%s334 + $0x60] sm:$0xff] %vm363, %v1091
      %1122 = vst.msk [vmem:[%s334 + $0x68] sm:$0xff] %vm363, %v1096
      %1123 = vst.msk [vmem:[%s334 + $0x70] sm:$0xff] %vm363, %v1101
      %1124 = vst.msk [vmem:[%s334 + $0x78] sm:$0xff] %vm363, %v1106
      %s1125 = smul.u32 16, %s20
      %p1126 = scmp.lt.s32.totalorder %s1125, 31
      %s1127 = scalar_select %p1126, %s1125, 31
      %s1128 = smul.addr %s1127, 8
      %s1129 = scalar_lea.vmem %s9, %s1128
      // Predicated region
      $region57: #{tpu_custom_call.1} parent=55 // pred_check
        %p1130 = pneg %p232
      $region58: #{tpu_custom_call.1} parent=55 // pred_check_branch
        %1132 = sbr.rel (%p1130) target = $region60
      $region59: #{tpu_custom_call.1} parent=55 // pred_region
        %s1133 = smul.u32 16, %s20
      $region60: #{tpu_custom_call.1} parent=55 // pred_fallthru
        _
    $region56: #{tpu_custom_call.1} parent=5 // pred_fallthru
      _
    %p1134 = scmp.le.s32.totalorder 2, %s15
    // Predicated region
    $region61: #{tpu_custom_call.1} parent=5 // pred_check
      %p1135 = pneg %p1134
    $region62: #{tpu_custom_call.1} parent=5 // pred_check_branch
      %1137 = sbr.rel (%p1135) target = $region64
    $region63: #{tpu_custom_call.1} parent=5 // pred_region
      %s1138 = ssub.s32 %s15, 2
      // Predicated region
      $region65: #{tpu_custom_call.1} parent=63 // pred_check
        %p1139 = pneg %p238
      $region66: #{tpu_custom_call.1} parent=63 // pred_check_branch
        %1141 = sbr.rel (%p1139) target = $region68
      $region67: #{tpu_custom_call.1} parent=63 // pred_region
        %s1142 = smul.u32 16, %s21
        %p1143 = scmp.lt.s32.totalorder %s1142, 31
        %s1144 = scalar_select %p1143, %s1142, 31
        %s1145 = smul.addr %s1144, 8
        %s1146 = scalar_lea.vmem %s9, %s1145
      $region68: #{tpu_custom_call.1} parent=63 // pred_fallthru
        _
    $region64: #{tpu_custom_call.1} parent=5 // pred_fallthru
      _
  $region6: #{tpu_custom_call.1} parent=0 // loop_footer
    %s19 = sadd.s32 1, %s15
  $region7: #{tpu_custom_call.1} parent=0 // loop_footer_branch
    %14 = sbr.rel target = $region3
  $region8: #{tpu_custom_call.1} parent=0 // loop_exit
    _

</llo_original>
